<compile_context>
chip_gen: v5e
topology: v5e:2x2
jax: 0.10.0
libtpu: 0.0.40
codegen_flags: <defaults>
</compile_context>

<pallas_src>
import functools

import jax
import jax.numpy as jnp
from jax import lax
from jax.experimental import pallas as pl
from jax.experimental.pallas import tpu as pltpu

BN_EPS = 1e-5
LANE = 128
_SUBLANE = {4: 8, 2: 16, 1: 32}      # itemsize -> sublane tiling (f32 / bf16 / int8)


def _round_up(x, m):
    return (x + m - 1) // m * m


def _tiled_bytes(shape, dtype):
    """VMEM bytes of one buffer of `shape` in the TPU tiled (sublane, lane) layout."""
    itemsize = jnp.dtype(dtype).itemsize
    dims = list(shape)
    if not dims:
        return 4
    dims[-1] = _round_up(dims[-1], LANE)
    if len(dims) >= 2:
        dims[-2] = _round_up(dims[-2], _SUBLANE.get(itemsize, 8))
    n = 1
    for d in dims:
        n *= d
    return n * itemsize


def _vmem_capacity_bytes():
    """Per-core VMEM capacity; conservative (v7x) fallback if the query is unavailable."""
    try:
        info = pltpu.get_tpu_info()
        for attr in ("vmem_capacity_bytes", "vmem_size_bytes", "vmem_bytes"):
            cap = getattr(info, attr, None)
            if cap:
                return int(cap)
    except Exception:
        pass
    return 64 * 2**20


# ------------------------------------------------------------------------------------------------
# Kernels
# ------------------------------------------------------------------------------------------------

def _stats_kernel(p_ref, w_ref, sum_ref, sq_ref):
    """Pass 1: one folded matmul per row tile -> per-tile channel sum / sum-of-squares."""
    y = jnp.dot(p_ref[...], w_ref[...], preferred_element_type=jnp.float32)   # (TM, Cpad) f32
    sum_ref[...] = jnp.sum(y, axis=0, keepdims=True)
    sq_ref[...] = jnp.sum(y * y, axis=0, keepdims=True)


def _apply_kernel(p_ref, w_ref, scale_ref, shift_ref, o_ref):
    """Pass 2: recompute the conv tile (one matmul) and apply the folded BN affine."""
    y = jnp.dot(p_ref[...], w_ref[...], preferred_element_type=jnp.float32)
    o_ref[...] = (y * scale_ref[...] + shift_ref[...]).astype(o_ref.dtype)


# ------------------------------------------------------------------------------------------------
# Wrapper
# ------------------------------------------------------------------------------------------------

@functools.partial(jax.jit,
                   static_argnames=("kernel_size", "stride", "padding", "groups", "compute_dtype"))
def conv_block(x_nchw, weight, gamma, beta, *, kernel_size, stride, padding, groups=1,
               compute_dtype=jnp.bfloat16):
    """ConvBlock forward. x_nchw: (N, Cin, H, W); weight: (Cout, Cin, K, K). Returns NCHW."""
    if groups != 1:
        # TODO(synk): grouped convolution (groups > 1) not implemented; module default is groups=1.
        raise NotImplementedError("groups > 1 not implemented")

    N, Cin, H, W = x_nchw.shape
    Cout = weight.shape[0]
    K = kernel_size
    Ho = (H + 2 * padding - K) // stride + 1
    Wo = (W + 2 * padding - K) // stride + 1
    R = N * Ho * Wo
    Ck = K * K * Cin
    Cpad = _round_up(Cout, LANE)
    out_dtype = x_nchw.dtype

    # ---- lane-dense patch matrix (R, Ck); tap slices are unit-stride, stride handled here ----
    x_nhwc = jnp.transpose(x_nchw, (0, 2, 3, 1)).astype(compute_dtype)
    x_pad = jnp.pad(x_nhwc, ((0, 0), (padding, padding), (padding, padding), (0, 0)))
    taps = []
    for kh in range(K):
        for kw in range(K):
            taps.append(x_pad[:, kh:kh + (Ho - 1) * stride + 1:stride,
                              kw:kw + (Wo - 1) * stride + 1:stride, :])
    patches = jnp.concatenate(taps, axis=-1).reshape(R, Ck)      # row r = (n, ho, wo), cols (kh,kw,ci)

    # ---- row tiling: ~1k rows per matmul, minimal zero padding (padded rows are stats-neutral) ----
    n_tiles = pl.cdiv(R, 1024)
    TM = _round_up(pl.cdiv(R, n_tiles), 8)
    Rp = TM * n_tiles
    if Rp != R:
        patches = jnp.pad(patches, ((0, Rp - R), (0, 0)))

    # ---- per-tap weights folded into one (Ck, Cpad) slab, Cout zero-padded to the lane width ----
    w_mat = jnp.transpose(weight, (2, 3, 1, 0)).reshape(Ck, Cout)
    w_mat = jnp.pad(w_mat, ((0, 0), (0, Cpad - Cout))).astype(compute_dtype)

    p_spec = pl.BlockSpec((TM, Ck), lambda i: (i, 0))            # one contiguous HBM run per block
    w_spec = pl.BlockSpec((Ck, Cpad), lambda i: (0, 0))          # resident across the grid
    part_spec = pl.BlockSpec((None, 1, Cpad), lambda i: (i, 0, 0))
    vec_spec = pl.BlockSpec((1, Cpad), lambda i: (0, 0))
    out_spec = pl.BlockSpec((TM, Cpad), lambda i: (i, 0))

    # ---- VMEM budget from tiled footprints, clamped to 3/4 of the device VMEM ----
    need = (2 * _tiled_bytes((TM, Ck), compute_dtype)            # patch block, double-buffered
            + 2 * _tiled_bytes((TM, Cpad), out_dtype)            # output block, double-buffered
            + _tiled_bytes((Ck, Cpad), compute_dtype)            # resident weight slab
            + 2 * _tiled_bytes((TM, Cpad), jnp.float32)          # f32 matmul / epilogue intermediates
            + 6 * _tiled_bytes((1, Cpad), jnp.float32)           # scale/shift/partial vectors
            + (2 << 20))                                         # compiler scratch slack
    vmem_limit = int(min(max(2 * need, 32 * 2**20), (_vmem_capacity_bytes() * 3) // 4))

    cparams = pltpu.CompilerParams(dimension_semantics=("parallel",),
                                   vmem_limit_bytes=vmem_limit)

    # ---- pass 1: per-tile partial sums (no carried state -> megacore-safe on v7x) ----
    sums, sqs = pl.pallas_call(
        _stats_kernel,
        grid=(n_tiles,),
        in_specs=[p_spec, w_spec],
        out_specs=(part_spec, part_spec),
        out_shape=(jax.ShapeDtypeStruct((n_tiles, 1, Cpad), jnp.float32),
                   jax.ShapeDtypeStruct((n_tiles, 1, Cpad), jnp.float32)),
        compiler_params=cparams,
    )(patches, w_mat)

    # ---- tiny hierarchical reduction + BN affine fold (XLA; O(Cpad) work) ----
    r = jnp.float32(R)                                           # true row count; padded rows add 0
    mean = jnp.sum(sums, axis=(0, 1)) / r                        # (Cpad,)
    var = jnp.maximum(jnp.sum(sqs, axis=(0, 1)) / r - mean * mean, 0.0)
    inv = lax.rsqrt(var + BN_EPS)
    gamma_p = jnp.pad(gamma.astype(jnp.float32), (0, Cpad - Cout))
    beta_p = jnp.pad(beta.astype(jnp.float32), (0, Cpad - Cout))
    scale = (gamma_p * inv).reshape(1, Cpad)
    shift = (beta_p - mean * gamma_p * inv).reshape(1, Cpad)

    # ---- pass 2: recompute conv tile (cheaper than an HBM round trip of pre-BN y) + scale/shift ----
    out_rows = pl.pallas_call(
        _apply_kernel,
        grid=(n_tiles,),
        in_specs=[p_spec, w_spec, vec_spec, vec_spec],
        out_specs=out_spec,
        out_shape=jax.ShapeDtypeStruct((Rp, Cpad), out_dtype),
        compiler_params=cparams,
    )(patches, w_mat, scale, shift)

    # (R, Cpad) row-major == (N, Ho, Wo, C); strip padding and return NCHW (PyTorch layout).
    out = out_rows[:R, :Cout].reshape(N, Ho, Wo, Cout)
    return jnp.transpose(out, (0, 3, 1, 2))


def _reference(x_nchw, weight, gamma, beta, *, stride, padding):
    y = lax.conv_general_dilated(
        x_nchw, weight, window_strides=(stride, stride),
        padding=[(padding, padding), (padding, padding)],
        dimension_numbers=("NCHW", "OIHW", "NCHW"))
    mean = jnp.mean(y, axis=(0, 2, 3), keepdims=True)
    var = jnp.mean((y - mean) ** 2, axis=(0, 2, 3), keepdims=True)
    return ((y - mean) * lax.rsqrt(var + BN_EPS)
            * gamma.reshape(1, -1, 1, 1) + beta.reshape(1, -1, 1, 1))


if __name__ == "__main__":
    # Module config: ConvBlock(in_channels=4, out_channels=8, kernel_size=3, stride=1, padding=1)
    N, Cin, H, W = 2, 4, 16, 16
    Cout, K, stride, padding = 8, 3, 1, 1

    key = jax.random.PRNGKey(0)
    kx, kw, kg, kb = jax.random.split(key, 4)
    x = jax.random.normal(kx, (N, Cin, H, W), dtype=jnp.float32)
    weight = jax.random.normal(kw, (Cout, Cin, K, K), dtype=jnp.float32) * 0.1
    gamma = 1.0 + 0.2 * jax.random.normal(kg, (Cout,), dtype=jnp.float32)
    beta = 0.1 * jax.random.normal(kb, (Cout,), dtype=jnp.float32)

    out = conv_block(x, weight, gamma, beta,
                     kernel_size=K, stride=stride, padding=padding,
                     compute_dtype=jnp.bfloat16)
    out = jax.block_until_ready(out)
    assert out.shape == (N, Cout, H, W), out.shape

    # Reference on bf16-rounded inputs (same MXU input quantization, f32 accumulation).
    xq = x.astype(jnp.bfloat16).astype(jnp.float32)
    wq = weight.astype(jnp.bfloat16).astype(jnp.float32)
    ref_q = _reference(xq, wq, gamma, beta, stride=stride, padding=padding)
    assert jnp.allclose(out, ref_q, atol=5e-3, rtol=5e-3), float(jnp.max(jnp.abs(out - ref_q)))

    # Loose sanity check against the full-f32 reference (difference = input bf16 quantization).
    ref = _reference(x, weight, gamma, beta, stride=stride, padding=padding)
    assert jnp.allclose(out, ref, atol=6e-2, rtol=6e-2), float(jnp.max(jnp.abs(out - ref)))

    print("KERNEL_OK")
</pallas_src>

<mosaic_0001>
module attributes {stable_mosaic.version = 11 : i64} {
  func.func @_stats_kernel(%arg0: i32, %arg1: memref<512x36xbf16, #tpu.memory_space<vmem>>, %arg2: memref<36x128xbf16, #tpu.memory_space<vmem>>, %arg3: memref<1x1x128xf32, #tpu.memory_space<vmem>>, %arg4: memref<1x1x128xf32, #tpu.memory_space<vmem>>) attributes {dimension_semantics = [#tpu.dimension_semantics<parallel>], iteration_bounds = array<i64: 1>, scalar_prefetch = 0 : i64, scratch_operands = 0 : i64, tpu.core_type = #tpu.core_type<tc>, window_params = [{transform_indices = @transform_0, window_bounds = array<i64: 512, 36>}, {pipeline_mode = #tpu.pipeline_mode<synchronous>, transform_indices = @transform_1, window_bounds = array<i64: 36, 128>}, {transform_indices = @transform_2, window_bounds = array<i64: 1, 1, 128>}, {transform_indices = @transform_3, window_bounds = array<i64: 1, 1, 128>}]} {
    %c0 = arith.constant 0 : index
    %c0_0 = arith.constant 0 : index
    %0 = vector.load %arg1[%c0, %c0_0] : memref<512x36xbf16, #tpu.memory_space<vmem>>, vector<512x36xbf16>
    %c0_1 = arith.constant 0 : index
    %c0_2 = arith.constant 0 : index
    %1 = vector.load %arg2[%c0_1, %c0_2] : memref<36x128xbf16, #tpu.memory_space<vmem>>, vector<36x128xbf16>
    %cst = arith.constant dense<0.000000e+00> : vector<512x128xf32>
    %2 = tpu.matmul %0, %1, %cst {dimension_numbers = #tpu.dot_dimension_numbers<[1], [0], [0], [1], [0, 0, 1, 1], [], []>} : vector<512x36xbf16>, vector<36x128xbf16>, vector<512x128xf32> -> vector<512x128xf32>
    %cst_3 = arith.constant dense<0.000000e+00> : vector<128xf32>
    %3 = vector.multi_reduction <add>, %2, %cst_3 [0] : vector<512x128xf32> to vector<128xf32>
    %4 = vector.shape_cast %3 : vector<128xf32> to vector<1x128xf32>
    %c0_4 = arith.constant 0 : index
    %c0_5 = arith.constant 0 : index
    %c0_6 = arith.constant 0 : index
    %5 = vector.load %arg3[%c0_4, %c0_5, %c0_6] : memref<1x1x128xf32, #tpu.memory_space<vmem>>, vector<1x1x128xf32>
    %6 = vector.shape_cast %5 : vector<1x1x128xf32> to vector<1x128xf32>
    %7 = vector.shape_cast %4 : vector<1x128xf32> to vector<1x1x128xf32>
    tpu.vector_store %arg3[%c0_4, %c0_5, %c0_6], %7 {strides = array<i32>} : memref<1x1x128xf32, #tpu.memory_space<vmem>>, vector<1x1x128xf32>,
    %8 = arith.mulf %2, %2 : vector<512x128xf32>
    %cst_7 = arith.constant dense<0.000000e+00> : vector<128xf32>
    %9 = vector.multi_reduction <add>, %8, %cst_7 [0] : vector<512x128xf32> to vector<128xf32>
    %10 = vector.shape_cast %9 : vector<128xf32> to vector<1x128xf32>
    %c0_8 = arith.constant 0 : index
    %c0_9 = arith.constant 0 : index
    %c0_10 = arith.constant 0 : index
    %11 = vector.load %arg4[%c0_8, %c0_9, %c0_10] : memref<1x1x128xf32, #tpu.memory_space<vmem>>, vector<1x1x128xf32>
    %12 = vector.shape_cast %11 : vector<1x1x128xf32> to vector<1x128xf32>
    %13 = vector.shape_cast %10 : vector<1x128xf32> to vector<1x1x128xf32>
    tpu.vector_store %arg4[%c0_8, %c0_9, %c0_10], %13 {strides = array<i32>} : memref<1x1x128xf32, #tpu.memory_space<vmem>>, vector<1x1x128xf32>,
    return
  }
  func.func @transform_0(%arg0: i32) -> (i32, i32) {
    %c0_i32 = arith.constant 0 : i32
    %c0_i32_0 = arith.constant 0 : i32
    return %arg0, %c0_i32 : i32, i32
  }
  func.func @transform_1(%arg0: i32) -> (i32, i32) {
    %c0_i32 = arith.constant 0 : i32
    %c0_i32_0 = arith.constant 0 : i32
    %c0_i32_1 = arith.constant 0 : i32
    return %c0_i32, %c0_i32_0 : i32, i32
  }
  func.func @transform_2(%arg0: i32) -> (i32, i32, i32) {
    %c0_i32 = arith.constant 0 : i32
    %c0_i32_0 = arith.constant 0 : i32
    %c0_i32_1 = arith.constant 0 : i32
    return %arg0, %c0_i32, %c0_i32_0 : i32, i32, i32
  }
  func.func @transform_3(%arg0: i32) -> (i32, i32, i32) {
    %c0_i32 = arith.constant 0 : i32
    %c0_i32_0 = arith.constant 0 : i32
    %c0_i32_1 = arith.constant 0 : i32
    return %arg0, %c0_i32, %c0_i32_0 : i32, i32, i32
  }
}

module attributes {stable_mosaic.version = 11 : i64} {
  func.func @_apply_kernel(%arg0: i32, %arg1: memref<512x36xbf16, #tpu.memory_space<vmem>>, %arg2: memref<36x128xbf16, #tpu.memory_space<vmem>>, %arg3: memref<1x128xf32, #tpu.memory_space<vmem>>, %arg4: memref<1x128xf32, #tpu.memory_space<vmem>>, %arg5: memref<512x128xf32, #tpu.memory_space<vmem>>) attributes {dimension_semantics = [#tpu.dimension_semantics<parallel>], iteration_bounds = array<i64: 1>, scalar_prefetch = 0 : i64, scratch_operands = 0 : i64, tpu.core_type = #tpu.core_type<tc>, window_params = [{transform_indices = @transform_0, window_bounds = array<i64: 512, 36>}, {pipeline_mode = #tpu.pipeline_mode<synchronous>, transform_indices = @transform_1, window_bounds = array<i64: 36, 128>}, {pipeline_mode = #tpu.pipeline_mode<synchronous>, transform_indices = @transform_2, window_bounds = array<i64: 1, 128>}, {pipeline_mode = #tpu.pipeline_mode<synchronous>, transform_indices = @transform_3, window_bounds = array<i64: 1, 128>}, {transform_indices = @transform_4, window_bounds = array<i64: 512, 128>}]} {
    %c0 = arith.constant 0 : index
    %c0_0 = arith.constant 0 : index
    %0 = vector.load %arg1[%c0, %c0_0] : memref<512x36xbf16, #tpu.memory_space<vmem>>, vector<512x36xbf16>
    %c0_1 = arith.constant 0 : index
    %c0_2 = arith.constant 0 : index
    %1 = vector.load %arg2[%c0_1, %c0_2] : memref<36x128xbf16, #tpu.memory_space<vmem>>, vector<36x128xbf16>
    %cst = arith.constant dense<0.000000e+00> : vector<512x128xf32>
    %2 = tpu.matmul %0, %1, %cst {dimension_numbers = #tpu.dot_dimension_numbers<[1], [0], [0], [1], [0, 0, 1, 1], [], []>} : vector<512x36xbf16>, vector<36x128xbf16>, vector<512x128xf32> -> vector<512x128xf32>
    %c0_3 = arith.constant 0 : index
    %c0_4 = arith.constant 0 : index
    %3 = vector.load %arg3[%c0_3, %c0_4] : memref<1x128xf32, #tpu.memory_space<vmem>>, vector<1x128xf32>
    %4 = vector.broadcast %3 : vector<1x128xf32> to vector<512x128xf32>
    %5 = arith.mulf %2, %4 : vector<512x128xf32>
    %c0_5 = arith.constant 0 : index
    %c0_6 = arith.constant 0 : index
    %6 = vector.load %arg4[%c0_5, %c0_6] : memref<1x128xf32, #tpu.memory_space<vmem>>, vector<1x128xf32>
    %7 = vector.broadcast %6 : vector<1x128xf32> to vector<512x128xf32>
    %8 = arith.addf %5, %7 : vector<512x128xf32>
    %c0_7 = arith.constant 0 : index
    %c0_8 = arith.constant 0 : index
    %9 = vector.load %arg5[%c0_7, %c0_8] : memref<512x128xf32, #tpu.memory_space<vmem>>, vector<512x128xf32>
    tpu.vector_store %arg5[%c0_7, %c0_8], %8 {strides = array<i32>} : memref<512x128xf32, #tpu.memory_space<vmem>>, vector<512x128xf32>,
    return
  }
  func.func @transform_0(%arg0: i32) -> (i32, i32) {
    %c0_i32 = arith.constant 0 : i32
    %c0_i32_0 = arith.constant 0 : i32
    return %arg0, %c0_i32 : i32, i32
  }
  func.func @transform_1(%arg0: i32) -> (i32, i32) {
    %c0_i32 = arith.constant 0 : i32
    %c0_i32_0 = arith.constant 0 : i32
    %c0_i32_1 = arith.constant 0 : i32
    return %c0_i32, %c0_i32_0 : i32, i32
  }
  func.func @transform_2(%arg0: i32) -> (i32, i32) {
    %c0_i32 = arith.constant 0 : i32
    %c0_i32_0 = arith.constant 0 : i32
    %c0_i32_1 = arith.constant 0 : i32
    return %c0_i32, %c0_i32_0 : i32, i32
  }
  func.func @transform_3(%arg0: i32) -> (i32, i32) {
    %c0_i32 = arith.constant 0 : i32
    %c0_i32_0 = arith.constant 0 : i32
    %c0_i32_1 = arith.constant 0 : i32
    return %c0_i32, %c0_i32_0 : i32, i32
  }
  func.func @transform_4(%arg0: i32) -> (i32, i32) {
    %c0_i32 = arith.constant 0 : i32
    %c0_i32_0 = arith.constant 0 : i32
    return %arg0, %c0_i32 : i32, i32
  }
}

</mosaic_0001>

<llo_original>
// kernel: conv_block.2
$region0: #{conv_block.2}
  #allocation0 [shape = 'u32[]', space=smem, size = 0x4, offset = 0x4, fixed_abs, tag = 'smem constant byte address 0x4 - core index']
  #allocation1 [shape = 'u32[72,128]{1,0:T(1,128)}', space=vmem, size = 0x9000, scoped, tag = 'internal scratch']
  %s0 = inlined_call_operand.vmem [shape: bf16[512,36], index: 0, kind: input, shape index: {}]
  %s1 = inlined_call_operand.vmem [shape: bf16[36,128], index: 1, kind: input, shape index: {}]
  %s2 = inlined_call_operand.vmem [shape: f32[1,1,128], index: 2, kind: output, shape index: {0}]
  %s3 = inlined_call_operand.vmem [shape: f32[1,1,128], index: 3, kind: output, shape index: {1}]
  %4 = xla_tuple %s2, %s3
  %s5 = sld [smem:[#allocation0]]
  $region26: #{conv_block.2} parent=0
    _
  %s7 = ssub.s32 1, %s5
  %s8 = scalar_select 0, %s7, %s5
  // Predicated region
  $region2: #{conv_block.2} parent=0 // pred_check
    _
  $region3: #{conv_block.2} parent=0 // pred_check_branch
    %10 = sbr.rel (0) target = $region5
  $region4: #{conv_block.2} parent=0 // pred_region
    _
  $region5: #{conv_block.2} parent=0 // pred_fallthru
    _
  // Predicated region
  $region6: #{conv_block.2} parent=0 // pred_check
    _
  $region7: #{conv_block.2} parent=0 // pred_check_branch
    %12 = sbr.rel (0) target = $region9
  $region8: #{conv_block.2} parent=0 // pred_region
    _
  $region9: #{conv_block.2} parent=0 // pred_fallthru
    _
  %v14 = vld [vmem:[%s0] sm:$0xf]
  %v15 = vld [vmem:[%s0 + $0x4] sm:$0xf]
  %v16 = vld [vmem:[%s0 + $0x8] sm:$0xf]
  %v17 = vld [vmem:[%s0 + $0xc] sm:$0xf]
  %v18 = vld [vmem:[%s0 + $0x10] sm:$0xf]
  %v19 = vld [vmem:[%s0 + $0x14] sm:$0xf]
  %v20 = vld [vmem:[%s0 + $0x18] sm:$0xf]
  %v21 = vld [vmem:[%s0 + $0x1c] sm:$0xf]
  %v22 = vld [vmem:[%s0 + $0x20] sm:$0xf]
  %v23 = vld [vmem:[%s0 + $0x24] sm:$0xf]
  %v24 = vld [vmem:[%s0 + $0x28] sm:$0xf]
  %v25 = vld [vmem:[%s0 + $0x2c] sm:$0xf]
  %v26 = vld [vmem:[%s0 + $0x30] sm:$0xf]
  %v27 = vld [vmem:[%s0 + $0x34] sm:$0xf]
  %v28 = vld [vmem:[%s0 + $0x38] sm:$0xf]
  %v29 = vld [vmem:[%s0 + $0x3c] sm:$0xf]
  %v30 = vld [vmem:[%s0 + $0x40] sm:$0xf]
  %v31 = vld [vmem:[%s0 + $0x44] sm:$0xf]
  %v32 = vld [vmem:[%s0 + $0x48] sm:$0xf]
  %v33 = vld [vmem:[%s0 + $0x4c] sm:$0xf]
  %v34 = vld [vmem:[%s0 + $0x50] sm:$0xf]
  %v35 = vld [vmem:[%s0 + $0x54] sm:$0xf]
  %v36 = vld [vmem:[%s0 + $0x58] sm:$0xf]
  %v37 = vld [vmem:[%s0 + $0x5c] sm:$0xf]
  %v38 = vld [vmem:[%s0 + $0x60] sm:$0xf]
  %v39 = vld [vmem:[%s0 + $0x64] sm:$0xf]
  %v40 = vld [vmem:[%s0 + $0x68] sm:$0xf]
  %v41 = vld [vmem:[%s0 + $0x6c] sm:$0xf]
  %v42 = vld [vmem:[%s0 + $0x70] sm:$0xf]
  %v43 = vld [vmem:[%s0 + $0x74] sm:$0xf]
  %v44 = vld [vmem:[%s0 + $0x78] sm:$0xf]
  %v45 = vld [vmem:[%s0 + $0x7c] sm:$0xf]
  %v46 = vld [vmem:[%s0 + $0x80] sm:$0xf]
  %v47 = vld [vmem:[%s0 + $0x84] sm:$0xf]
  %v48 = vld [vmem:[%s0 + $0x88] sm:$0xf]
  %v49 = vld [vmem:[%s0 + $0x8c] sm:$0xf]
  %v50 = vld [vmem:[%s0 + $0x90] sm:$0xf]
  %v51 = vld [vmem:[%s0 + $0x94] sm:$0xf]
  %v52 = vld [vmem:[%s0 + $0x98] sm:$0xf]
  %v53 = vld [vmem:[%s0 + $0x9c] sm:$0xf]
  %v54 = vld [vmem:[%s0 + $0xa0] sm:$0xf]
  %v55 = vld [vmem:[%s0 + $0xa4] sm:$0xf]
  %v56 = vld [vmem:[%s0 + $0xa8] sm:$0xf]
  %v57 = vld [vmem:[%s0 + $0xac] sm:$0xf]
  %v58 = vld [vmem:[%s0 + $0xb0] sm:$0xf]
  %v59 = vld [vmem:[%s0 + $0xb4] sm:$0xf]
  %v60 = vld [vmem:[%s0 + $0xb8] sm:$0xf]
  %v61 = vld [vmem:[%s0 + $0xbc] sm:$0xf]
  %v62 = vld [vmem:[%s0 + $0xc0] sm:$0xf]
  %v63 = vld [vmem:[%s0 + $0xc4] sm:$0xf]
  %v64 = vld [vmem:[%s0 + $0xc8] sm:$0xf]
  %v65 = vld [vmem:[%s0 + $0xcc] sm:$0xf]
  %v66 = vld [vmem:[%s0 + $0xd0] sm:$0xf]
  %v67 = vld [vmem:[%s0 + $0xd4] sm:$0xf]
  %v68 = vld [vmem:[%s0 + $0xd8] sm:$0xf]
  %v69 = vld [vmem:[%s0 + $0xdc] sm:$0xf]
  %v70 = vld [vmem:[%s0 + $0xe0] sm:$0xf]
  %v71 = vld [vmem:[%s0 + $0xe4] sm:$0xf]
  %v72 = vld [vmem:[%s0 + $0xe8] sm:$0xf]
  %v73 = vld [vmem:[%s0 + $0xec] sm:$0xf]
  %v74 = vld [vmem:[%s0 + $0xf0] sm:$0xf]
  %v75 = vld [vmem:[%s0 + $0xf4] sm:$0xf]
  %v76 = vld [vmem:[%s0 + $0xf8] sm:$0xf]
  %v77 = vld [vmem:[%s0 + $0xfc] sm:$0xf]
  %v78 = vld [vmem:[%s1] sm:$0xf]
  %v79 = vld [vmem:[%s1 + $0x4] sm:$0xf]
  %v80 = vld [vmem:[%s1 + $0x8] sm:$0xf]
  %v81 = vld [vmem:[%s1 + $0xc] sm:$0xf]
  %v82 = vld [vmem:[%s1 + $0x10] sm:$0x3]
  %v147 = vunpack.c.l.b16 %v14
  %v148 = vunpack.c.l.b16 %v15
  %v149 = vunpack.c.l.b16 %v16
  %v150 = vunpack.c.l.b16 %v17
  %v151 = vunpack.c.l.b16 %v18
  %v152 = vunpack.c.l.b16 %v19
  %v153 = vunpack.c.l.b16 %v20
  %v154 = vunpack.c.l.b16 %v21
  %v155 = vunpack.c.l.b16 %v22
  %v156 = vunpack.c.l.b16 %v23
  %v157 = vunpack.c.l.b16 %v24
  %v158 = vunpack.c.l.b16 %v25
  %v159 = vunpack.c.l.b16 %v26
  %v160 = vunpack.c.l.b16 %v27
  %v161 = vunpack.c.l.b16 %v28
  %v162 = vunpack.c.l.b16 %v29
  %v163 = vunpack.c.l.b16 %v30
  %v164 = vunpack.c.l.b16 %v31
  %v165 = vunpack.c.l.b16 %v32
  %v166 = vunpack.c.l.b16 %v33
  %v167 = vunpack.c.l.b16 %v34
  %v168 = vunpack.c.l.b16 %v35
  %v169 = vunpack.c.l.b16 %v36
  %v170 = vunpack.c.l.b16 %v37
  %v171 = vunpack.c.l.b16 %v38
  %v172 = vunpack.c.l.b16 %v39
  %v173 = vunpack.c.l.b16 %v40
  %v174 = vunpack.c.l.b16 %v41
  %v175 = vunpack.c.l.b16 %v42
  %v176 = vunpack.c.l.b16 %v43
  %v177 = vunpack.c.l.b16 %v44
  %v178 = vunpack.c.l.b16 %v45
  %v179 = vunpack.c.l.b16 %v46
  %v180 = vunpack.c.l.b16 %v47
  %v181 = vunpack.c.l.b16 %v48
  %v182 = vunpack.c.l.b16 %v49
  %v183 = vunpack.c.l.b16 %v50
  %v184 = vunpack.c.l.b16 %v51
  %v185 = vunpack.c.l.b16 %v52
  %v186 = vunpack.c.l.b16 %v53
  %v187 = vunpack.c.l.b16 %v54
  %v188 = vunpack.c.l.b16 %v55
  %v189 = vunpack.c.l.b16 %v56
  %v190 = vunpack.c.l.b16 %v57
  %v191 = vunpack.c.l.b16 %v58
  %v192 = vunpack.c.l.b16 %v59
  %v193 = vunpack.c.l.b16 %v60
  %v194 = vunpack.c.l.b16 %v61
  %v195 = vunpack.c.l.b16 %v62
  %v196 = vunpack.c.l.b16 %v63
  %v197 = vunpack.c.l.b16 %v64
  %v198 = vunpack.c.l.b16 %v65
  %v199 = vunpack.c.l.b16 %v66
  %v200 = vunpack.c.l.b16 %v67
  %v201 = vunpack.c.l.b16 %v68
  %v202 = vunpack.c.l.b16 %v69
  %v203 = vunpack.c.l.b16 %v70
  %v204 = vunpack.c.l.b16 %v71
  %v205 = vunpack.c.l.b16 %v72
  %v206 = vunpack.c.l.b16 %v73
  %v207 = vunpack.c.l.b16 %v74
  %v208 = vunpack.c.l.b16 %v75
  %v209 = vunpack.c.l.b16 %v76
  %v210 = vunpack.c.l.b16 %v77
  %v211 = vpack.c.b16 %v148, %v147
  %v212 = vpack.c.b16 %v150, %v149
  %v213 = vpack.c.b16 %v152, %v151
  %v214 = vpack.c.b16 %v154, %v153
  %v215 = vpack.c.b16 %v156, %v155
  %v216 = vpack.c.b16 %v158, %v157
  %v217 = vpack.c.b16 %v160, %v159
  %v218 = vpack.c.b16 %v162, %v161
  %v219 = vpack.c.b16 %v164, %v163
  %v220 = vpack.c.b16 %v166, %v165
  %v221 = vpack.c.b16 %v168, %v167
  %v222 = vpack.c.b16 %v170, %v169
  %v223 = vpack.c.b16 %v172, %v171
  %v224 = vpack.c.b16 %v174, %v173
  %v225 = vpack.c.b16 %v176, %v175
  %v226 = vpack.c.b16 %v178, %v177
  %v227 = vpack.c.b16 %v180, %v179
  %v228 = vpack.c.b16 %v182, %v181
  %v229 = vpack.c.b16 %v184, %v183
  %v230 = vpack.c.b16 %v186, %v185
  %v231 = vpack.c.b16 %v188, %v187
  %v232 = vpack.c.b16 %v190, %v189
  %v233 = vpack.c.b16 %v192, %v191
  %v234 = vpack.c.b16 %v194, %v193
  %v235 = vpack.c.b16 %v196, %v195
  %v236 = vpack.c.b16 %v198, %v197
  %v237 = vpack.c.b16 %v200, %v199
  %v238 = vpack.c.b16 %v202, %v201
  %v239 = vpack.c.b16 %v204, %v203
  %v240 = vpack.c.b16 %v206, %v205
  %v241 = vpack.c.b16 %v208, %v207
  %v242 = vpack.c.b16 %v210, %v209
  %v248 = vunpack.c.l.b16 %v78
  %v249 = vunpack.c.l.b16 %v79
  %v250 = vunpack.c.l.b16 %v80
  %v251 = vunpack.c.l.b16 %v81
  %v252 = vunpack.c.l.b16 %v82
  %v253 = vpack.c.b16 %v249, %v248
  %v254 = vpack.c.b16 %v251, %v250
  %v255 = vpack.c.b16 %v252, %v252
  %vm258 = vcmask 293888
  %v260 = vsel %vm258, %v211, 0
  %v263 = vsel %vm258, %v212, 0
  %v266 = vsel %vm258, %v213, 0
  %v269 = vsel %vm258, %v214, 0
  %v272 = vsel %vm258, %v215, 0
  %v275 = vsel %vm258, %v216, 0
  %v278 = vsel %vm258, %v217, 0
  %v281 = vsel %vm258, %v218, 0
  %v284 = vsel %vm258, %v219, 0
  %v287 = vsel %vm258, %v220, 0
  %v290 = vsel %vm258, %v221, 0
  %v293 = vsel %vm258, %v222, 0
  %v296 = vsel %vm258, %v223, 0
  %v299 = vsel %vm258, %v224, 0
  %v302 = vsel %vm258, %v225, 0
  %v305 = vsel %vm258, %v226, 0
  %v308 = vsel %vm258, %v227, 0
  %v311 = vsel %vm258, %v228, 0
  %v314 = vsel %vm258, %v229, 0
  %v317 = vsel %vm258, %v230, 0
  %v320 = vsel %vm258, %v231, 0
  %v323 = vsel %vm258, %v232, 0
  %v326 = vsel %vm258, %v233, 0
  %v329 = vsel %vm258, %v234, 0
  %v332 = vsel %vm258, %v235, 0
  %v335 = vsel %vm258, %v236, 0
  %v338 = vsel %vm258, %v237, 0
  %v341 = vsel %vm258, %v238, 0
  %v344 = vsel %vm258, %v239, 0
  %v347 = vsel %vm258, %v240, 0
  %v350 = vsel %vm258, %v241, 0
  %v353 = vsel %vm258, %v242, 0
  %vm355 = vcmask 1041408
  %v357 = vsel %vm355, %v255, 0
  %359 = vmatpush.bf16.msra.mxu0 0
  %360 = vmatpush.bf16.msra.mxu0 0
  %361 = vmatpush.bf16.msra.mxu0 0
  %362 = vmatpush.bf16.msra.mxu0 0
  %363 = vmatpush.bf16.msra.mxu0 0
  %364 = vmatpush.bf16.msra.mxu0 %v357
  %365 = vmatpush.bf16.msra.mxu0 %v254
  %366 = vmatpush.bf16.msra.mxu0 %v253
  %367 = vmatmul.bf16.gmra.mxu0 %v260
  %v368 = vpop.f32.mrf.mxu0
  %v369 = vadd.f32 0.0, %v368
  %v370 = vpop.f32.mrf.mxu0
  %v371 = vadd.f32 0.0, %v370
  %372 = vmatmul.bf16.gmra.mxu0 %v263
  %v373 = vpop.f32.mrf.mxu0
  %v374 = vadd.f32 0.0, %v373
  %v375 = vpop.f32.mrf.mxu0
  %v376 = vadd.f32 0.0, %v375
  %377 = vmatmul.bf16.gmra.mxu0 %v266
  %v378 = vpop.f32.mrf.mxu0
  %v379 = vadd.f32 0.0, %v378
  %v380 = vpop.f32.mrf.mxu0
  %v381 = vadd.f32 0.0, %v380
  %382 = vmatmul.bf16.gmra.mxu0 %v269
  %v383 = vpop.f32.mrf.mxu0
  %v384 = vadd.f32 0.0, %v383
  %v385 = vpop.f32.mrf.mxu0
  %v386 = vadd.f32 0.0, %v385
  %387 = vmatmul.bf16.gmra.mxu0 %v272
  %v388 = vpop.f32.mrf.mxu0
  %v389 = vadd.f32 0.0, %v388
  %v390 = vpop.f32.mrf.mxu0
  %v391 = vadd.f32 0.0, %v390
  %392 = vmatmul.bf16.gmra.mxu0 %v275
  %v393 = vpop.f32.mrf.mxu0
  %v394 = vadd.f32 0.0, %v393
  %v395 = vpop.f32.mrf.mxu0
  %v396 = vadd.f32 0.0, %v395
  %397 = vmatmul.bf16.gmra.mxu0 %v278
  %v398 = vpop.f32.mrf.mxu0
  %v399 = vadd.f32 0.0, %v398
  %v400 = vpop.f32.mrf.mxu0
  %v401 = vadd.f32 0.0, %v400
  %402 = vmatmul.bf16.gmra.mxu0 %v281
  %v403 = vpop.f32.mrf.mxu0
  %v404 = vadd.f32 0.0, %v403
  %v405 = vpop.f32.mrf.mxu0
  %v406 = vadd.f32 0.0, %v405
  %407 = vmatmul.bf16.gmra.mxu0 %v284
  %v408 = vpop.f32.mrf.mxu0
  %v409 = vadd.f32 0.0, %v408
  %v410 = vpop.f32.mrf.mxu0
  %v411 = vadd.f32 0.0, %v410
  %412 = vmatmul.bf16.gmra.mxu0 %v287
  %v413 = vpop.f32.mrf.mxu0
  %v414 = vadd.f32 0.0, %v413
  %v415 = vpop.f32.mrf.mxu0
  %v416 = vadd.f32 0.0, %v415
  %417 = vmatmul.bf16.gmra.mxu0 %v290
  %v418 = vpop.f32.mrf.mxu0
  %v419 = vadd.f32 0.0, %v418
  %v420 = vpop.f32.mrf.mxu0
  %v421 = vadd.f32 0.0, %v420
  %422 = vmatmul.bf16.gmra.mxu0 %v293
  %v423 = vpop.f32.mrf.mxu0
  %v424 = vadd.f32 0.0, %v423
  %v425 = vpop.f32.mrf.mxu0
  %v426 = vadd.f32 0.0, %v425
  %427 = vmatmul.bf16.gmra.mxu0 %v296
  %v428 = vpop.f32.mrf.mxu0
  %v429 = vadd.f32 0.0, %v428
  %v430 = vpop.f32.mrf.mxu0
  %v431 = vadd.f32 0.0, %v430
  %432 = vmatmul.bf16.gmra.mxu0 %v299
  %v433 = vpop.f32.mrf.mxu0
  %v434 = vadd.f32 0.0, %v433
  %v435 = vpop.f32.mrf.mxu0
  %v436 = vadd.f32 0.0, %v435
  %437 = vmatmul.bf16.gmra.mxu0 %v302
  %v438 = vpop.f32.mrf.mxu0
  %v439 = vadd.f32 0.0, %v438
  %v440 = vpop.f32.mrf.mxu0
  %v441 = vadd.f32 0.0, %v440
  %442 = vmatmul.bf16.gmra.mxu0 %v305
  %v443 = vpop.f32.mrf.mxu0
  %v444 = vadd.f32 0.0, %v443
  %v445 = vpop.f32.mrf.mxu0
  %v446 = vadd.f32 0.0, %v445
  %447 = vmatmul.bf16.gmra.mxu0 %v308
  %v448 = vpop.f32.mrf.mxu0
  %v449 = vadd.f32 0.0, %v448
  %v450 = vpop.f32.mrf.mxu0
  %v451 = vadd.f32 0.0, %v450
  %452 = vmatmul.bf16.gmra.mxu0 %v311
  %v453 = vpop.f32.mrf.mxu0
  %v454 = vadd.f32 0.0, %v453
  %v455 = vpop.f32.mrf.mxu0
  %v456 = vadd.f32 0.0, %v455
  %457 = vmatmul.bf16.gmra.mxu0 %v314
  %v458 = vpop.f32.mrf.mxu0
  %v459 = vadd.f32 0.0, %v458
  %v460 = vpop.f32.mrf.mxu0
  %v461 = vadd.f32 0.0, %v460
  %462 = vmatmul.bf16.gmra.mxu0 %v317
  %v463 = vpop.f32.mrf.mxu0
  %v464 = vadd.f32 0.0, %v463
  %v465 = vpop.f32.mrf.mxu0
  %v466 = vadd.f32 0.0, %v465
  %467 = vmatmul.bf16.gmra.mxu0 %v320
  %v468 = vpop.f32.mrf.mxu0
  %v469 = vadd.f32 0.0, %v468
  %v470 = vpop.f32.mrf.mxu0
  %v471 = vadd.f32 0.0, %v470
  %472 = vmatmul.bf16.gmra.mxu0 %v323
  %v473 = vpop.f32.mrf.mxu0
  %v474 = vadd.f32 0.0, %v473
  %v475 = vpop.f32.mrf.mxu0
  %v476 = vadd.f32 0.0, %v475
  %477 = vmatmul.bf16.gmra.mxu0 %v326
  %v478 = vpop.f32.mrf.mxu0
  %v479 = vadd.f32 0.0, %v478
  %v480 = vpop.f32.mrf.mxu0
  %v481 = vadd.f32 0.0, %v480
  %482 = vmatmul.bf16.gmra.mxu0 %v329
  %v483 = vpop.f32.mrf.mxu0
  %v484 = vadd.f32 0.0, %v483
  %v485 = vpop.f32.mrf.mxu0
  %v486 = vadd.f32 0.0, %v485
  %487 = vmatmul.bf16.gmra.mxu0 %v332
  %v488 = vpop.f32.mrf.mxu0
  %v489 = vadd.f32 0.0, %v488
  %v490 = vpop.f32.mrf.mxu0
  %v491 = vadd.f32 0.0, %v490
  %492 = vmatmul.bf16.gmra.mxu0 %v335
  %v493 = vpop.f32.mrf.mxu0
  %v494 = vadd.f32 0.0, %v493
  %v495 = vpop.f32.mrf.mxu0
  %v496 = vadd.f32 0.0, %v495
  %497 = vmatmul.bf16.gmra.mxu0 %v338
  %v498 = vpop.f32.mrf.mxu0
  %v499 = vadd.f32 0.0, %v498
  %v500 = vpop.f32.mrf.mxu0
  %v501 = vadd.f32 0.0, %v500
  %502 = vmatmul.bf16.gmra.mxu0 %v341
  %v503 = vpop.f32.mrf.mxu0
  %v504 = vadd.f32 0.0, %v503
  %v505 = vpop.f32.mrf.mxu0
  %v506 = vadd.f32 0.0, %v505
  %507 = vmatmul.bf16.gmra.mxu0 %v344
  %v508 = vpop.f32.mrf.mxu0
  %v509 = vadd.f32 0.0, %v508
  %v510 = vpop.f32.mrf.mxu0
  %v511 = vadd.f32 0.0, %v510
  %512 = vmatmul.bf16.gmra.mxu0 %v347
  %v513 = vpop.f32.mrf.mxu0
  %v514 = vadd.f32 0.0, %v513
  %v515 = vpop.f32.mrf.mxu0
  %v516 = vadd.f32 0.0, %v515
  %517 = vmatmul.bf16.gmra.mxu0 %v350
  %v518 = vpop.f32.mrf.mxu0
  %v519 = vadd.f32 0.0, %v518
  %v520 = vpop.f32.mrf.mxu0
  %v521 = vadd.f32 0.0, %v520
  %522 = vmatmul.bf16.gmra.mxu0 %v353
  %v523 = vpop.f32.mrf.mxu0
  %v524 = vadd.f32 0.0, %v523
  %v525 = vpop.f32.mrf.mxu0
  %v526 = vadd.f32 0.0, %v525
  %527 = vdwg.mxu0
  %v528 = vadd.f32 %v369, %v371
  %v529 = vadd.f32 %v528, %v374
  %v530 = vadd.f32 %v529, %v376
  %v531 = vadd.f32 %v530, %v379
  %v532 = vadd.f32 %v531, %v381
  %v533 = vadd.f32 %v532, %v384
  %v534 = vadd.f32 %v533, %v386
  %v535 = vadd.f32 %v534, %v389
  %v536 = vadd.f32 %v535, %v391
  %v537 = vadd.f32 %v536, %v394
  %v538 = vadd.f32 %v537, %v396
  %v539 = vadd.f32 %v538, %v399
  %v540 = vadd.f32 %v539, %v401
  %v541 = vadd.f32 %v540, %v404
  %v542 = vadd.f32 %v541, %v406
  %v543 = vadd.f32 %v542, %v409
  %v544 = vadd.f32 %v543, %v411
  %v545 = vadd.f32 %v544, %v414
  %v546 = vadd.f32 %v545, %v416
  %v547 = vadd.f32 %v546, %v419
  %v548 = vadd.f32 %v547, %v421
  %v549 = vadd.f32 %v548, %v424
  %v550 = vadd.f32 %v549, %v426
  %v551 = vadd.f32 %v550, %v429
  %v552 = vadd.f32 %v551, %v431
  %v553 = vadd.f32 %v552, %v434
  %v554 = vadd.f32 %v553, %v436
  %v555 = vadd.f32 %v554, %v439
  %v556 = vadd.f32 %v555, %v441
  %v557 = vadd.f32 %v556, %v444
  %v558 = vadd.f32 %v557, %v446
  %v559 = vadd.f32 %v558, %v449
  %v560 = vadd.f32 %v559, %v451
  %v561 = vadd.f32 %v560, %v454
  %v562 = vadd.f32 %v561, %v456
  %v563 = vadd.f32 %v562, %v459
  %v564 = vadd.f32 %v563, %v461
  %v565 = vadd.f32 %v564, %v464
  %v566 = vadd.f32 %v565, %v466
  %v567 = vadd.f32 %v566, %v469
  %v568 = vadd.f32 %v567, %v471
  %v569 = vadd.f32 %v568, %v474
  %v570 = vadd.f32 %v569, %v476
  %v571 = vadd.f32 %v570, %v479
  %v572 = vadd.f32 %v571, %v481
  %v573 = vadd.f32 %v572, %v484
  %v574 = vadd.f32 %v573, %v486
  %v575 = vadd.f32 %v574, %v489
  %v576 = vadd.f32 %v575, %v491
  %v577 = vadd.f32 %v576, %v494
  %v578 = vadd.f32 %v577, %v496
  %v579 = vadd.f32 %v578, %v499
  %v580 = vadd.f32 %v579, %v501
  %v581 = vadd.f32 %v580, %v504
  %v582 = vadd.f32 %v581, %v506
  %v583 = vadd.f32 %v582, %v509
  %v584 = vadd.f32 %v583, %v511
  %v585 = vadd.f32 %v584, %v514
  %v586 = vadd.f32 %v585, %v516
  %v587 = vadd.f32 %v586, %v519
  %v588 = vadd.f32 %v587, %v521
  %v589 = vadd.f32 %v588, %v524
  %v590 = vadd.f32 %v589, %v526
  %v591 = vrot.slane %v590, 4
  %v592 = vadd.f32 %v590, %v591
  %v593 = vrot.slane %v592, 2
  %v594 = vadd.f32 %v592, %v593
  %v595 = vrot.slane %v594, 1
  %v596 = vadd.f32 %v594, %v595
  %597 = vst [vmem:[%s2] sm:$0x1] %v596
  %v598 = vmul.f32 %v369, %v369
  %v599 = vmul.f32 %v371, %v371
  %v600 = vmul.f32 %v374, %v374
  %v601 = vmul.f32 %v376, %v376
  %v602 = vmul.f32 %v379, %v379
  %v603 = vmul.f32 %v381, %v381
  %v604 = vmul.f32 %v384, %v384
  %v605 = vmul.f32 %v386, %v386
  %v606 = vmul.f32 %v389, %v389
  %v607 = vmul.f32 %v391, %v391
  %v608 = vmul.f32 %v394, %v394
  %v609 = vmul.f32 %v396, %v396
  %v610 = vmul.f32 %v399, %v399
  %v611 = vmul.f32 %v401, %v401
  %v612 = vmul.f32 %v404, %v404
  %v613 = vmul.f32 %v406, %v406
  %v614 = vmul.f32 %v409, %v409
  %v615 = vmul.f32 %v411, %v411
  %v616 = vmul.f32 %v414, %v414
  %v617 = vmul.f32 %v416, %v416
  %v618 = vmul.f32 %v419, %v419
  %v619 = vmul.f32 %v421, %v421
  %v620 = vmul.f32 %v424, %v424
  %v621 = vmul.f32 %v426, %v426
  %v622 = vmul.f32 %v429, %v429
  %v623 = vmul.f32 %v431, %v431
  %v624 = vmul.f32 %v434, %v434
  %v625 = vmul.f32 %v436, %v436
  %v626 = vmul.f32 %v439, %v439
  %v627 = vmul.f32 %v441, %v441
  %v628 = vmul.f32 %v444, %v444
  %v629 = vmul.f32 %v446, %v446
  %v630 = vmul.f32 %v449, %v449
  %v631 = vmul.f32 %v451, %v451
  %v632 = vmul.f32 %v454, %v454
  %v633 = vmul.f32 %v456, %v456
  %v634 = vmul.f32 %v459, %v459
  %v635 = vmul.f32 %v461, %v461
  %v636 = vmul.f32 %v464, %v464
  %v637 = vmul.f32 %v466, %v466
  %v638 = vmul.f32 %v469, %v469
  %v639 = vmul.f32 %v471, %v471
  %v640 = vmul.f32 %v474, %v474
  %v641 = vmul.f32 %v476, %v476
  %v642 = vmul.f32 %v479, %v479
  %v643 = vmul.f32 %v481, %v481
  %v644 = vmul.f32 %v484, %v484
  %v645 = vmul.f32 %v486, %v486
  %v646 = vmul.f32 %v489, %v489
  %v647 = vmul.f32 %v491, %v491
  %v648 = vmul.f32 %v494, %v494
  %v649 = vmul.f32 %v496, %v496
  %v650 = vmul.f32 %v499, %v499
  %v651 = vmul.f32 %v501, %v501
  %v652 = vmul.f32 %v504, %v504
  %v653 = vmul.f32 %v506, %v506
  %v654 = vmul.f32 %v509, %v509
  %v655 = vmul.f32 %v511, %v511
  %v656 = vmul.f32 %v514, %v514
  %v657 = vmul.f32 %v516, %v516
  %v658 = vmul.f32 %v519, %v519
  %v659 = vmul.f32 %v521, %v521
  %v660 = vmul.f32 %v524, %v524
  %v661 = vmul.f32 %v526, %v526
  %v662 = vadd.f32 %v598, %v599
  %v663 = vadd.f32 %v662, %v600
  %v664 = vadd.f32 %v663, %v601
  %v665 = vadd.f32 %v664, %v602
  %v666 = vadd.f32 %v665, %v603
  %v667 = vadd.f32 %v666, %v604
  %v668 = vadd.f32 %v667, %v605
  %v669 = vadd.f32 %v668, %v606
  %v670 = vadd.f32 %v669, %v607
  %v671 = vadd.f32 %v670, %v608
  %v672 = vadd.f32 %v671, %v609
  %v673 = vadd.f32 %v672, %v610
  %v674 = vadd.f32 %v673, %v611
  %v675 = vadd.f32 %v674, %v612
  %v676 = vadd.f32 %v675, %v613
  %v677 = vadd.f32 %v676, %v614
  %v678 = vadd.f32 %v677, %v615
  %v679 = vadd.f32 %v678, %v616
  %v680 = vadd.f32 %v679, %v617
  %v681 = vadd.f32 %v680, %v618
  %v682 = vadd.f32 %v681, %v619
  %v683 = vadd.f32 %v682, %v620
  %v684 = vadd.f32 %v683, %v621
  %v685 = vadd.f32 %v684, %v622
  %v686 = vadd.f32 %v685, %v623
  %v687 = vadd.f32 %v686, %v624
  %v688 = vadd.f32 %v687, %v625
  %v689 = vadd.f32 %v688, %v626
  %v690 = vadd.f32 %v689, %v627
  %v691 = vadd.f32 %v690, %v628
  %v692 = vadd.f32 %v691, %v629
  %v693 = vadd.f32 %v692, %v630
  %v694 = vadd.f32 %v693, %v631
  %v695 = vadd.f32 %v694, %v632
  %v696 = vadd.f32 %v695, %v633
  %v697 = vadd.f32 %v696, %v634
  %v698 = vadd.f32 %v697, %v635
  %v699 = vadd.f32 %v698, %v636
  %v700 = vadd.f32 %v699, %v637
  %v701 = vadd.f32 %v700, %v638
  %v702 = vadd.f32 %v701, %v639
  %v703 = vadd.f32 %v702, %v640
  %v704 = vadd.f32 %v703, %v641
  %v705 = vadd.f32 %v704, %v642
  %v706 = vadd.f32 %v705, %v643
  %v707 = vadd.f32 %v706, %v644
  %v708 = vadd.f32 %v707, %v645
  %v709 = vadd.f32 %v708, %v646
  %v710 = vadd.f32 %v709, %v647
  %v711 = vadd.f32 %v710, %v648
  %v712 = vadd.f32 %v711, %v649
  %v713 = vadd.f32 %v712, %v650
  %v714 = vadd.f32 %v713, %v651
  %v715 = vadd.f32 %v714, %v652
  %v716 = vadd.f32 %v715, %v653
  %v717 = vadd.f32 %v716, %v654
  %v718 = vadd.f32 %v717, %v655
  %v719 = vadd.f32 %v718, %v656
  %v720 = vadd.f32 %v719, %v657
  %v721 = vadd.f32 %v720, %v658
  %v722 = vadd.f32 %v721, %v659
  %v723 = vadd.f32 %v722, %v660
  %v724 = vadd.f32 %v723, %v661
  %v725 = vrot.slane %v724, 4
  %v726 = vadd.f32 %v724, %v725
  %v727 = vrot.slane %v726, 2
  %v728 = vadd.f32 %v726, %v727
  %v729 = vrot.slane %v728, 1
  %v730 = vadd.f32 %v728, %v729
  %731 = vst [vmem:[%s3] sm:$0x1] %v730
  // Predicated region
  $region10: #{conv_block.2} parent=0 // pred_check
    _
  $region11: #{conv_block.2} parent=0 // pred_check_branch
    %733 = sbr.rel (0) target = $region13
  $region12: #{conv_block.2} parent=0 // pred_region
    _
  $region13: #{conv_block.2} parent=0 // pred_fallthru
    _
  // Predicated region
  $region14: #{conv_block.2} parent=0 // pred_check
    _
  $region15: #{conv_block.2} parent=0 // pred_check_branch
    %735 = sbr.rel (0) target = $region17
  $region16: #{conv_block.2} parent=0 // pred_region
    _
  $region17: #{conv_block.2} parent=0 // pred_fallthru
    _
  // Predicated region
  $region18: #{conv_block.2} parent=0 // pred_check
    _
  $region19: #{conv_block.2} parent=0 // pred_check_branch
    %737 = sbr.rel (0) target = $region21
  $region20: #{conv_block.2} parent=0 // pred_region
    _
  $region21: #{conv_block.2} parent=0 // pred_fallthru
    _
  // Predicated region
  $region22: #{conv_block.2} parent=0 // pred_check
    _
  $region23: #{conv_block.2} parent=0 // pred_check_branch
    %739 = sbr.rel (0) target = $region25
  $region24: #{conv_block.2} parent=0 // pred_region
    _
  $region25: #{conv_block.2} parent=0 // pred_fallthru
    _

// kernel: conv_block.3
$region0: #{conv_block.3}
  #allocation0 [shape = 'u32[]', space=smem, size = 0x4, offset = 0x4, fixed_abs, tag = 'smem constant byte address 0x4 - core index']
  #allocation1 [shape = 'u32[72,128]{1,0:T(1,128)}', space=vmem, size = 0x9000, scoped, tag = 'internal scratch']
  %s0 = inlined_call_operand.vmem [shape: bf16[512,36], index: 0, kind: input, shape index: {}]
  %s1 = inlined_call_operand.vmem [shape: bf16[36,128], index: 1, kind: input, shape index: {}]
  %s2 = inlined_call_operand.vmem [shape: f32[1,128], index: 2, kind: input, shape index: {}]
  %s3 = inlined_call_operand.vmem [shape: f32[1,128], index: 3, kind: input, shape index: {}]
  %s4 = inlined_call_operand.vmem [shape: f32[512,128], index: 4, kind: output, shape index: {}]
  %s5 = sld [smem:[#allocation0]]
  $region26: #{conv_block.3} parent=0
    _
  %s7 = ssub.s32 1, %s5
  %s8 = scalar_select 0, %s7, %s5
  // Predicated region
  $region2: #{conv_block.3} parent=0 // pred_check
    _
  $region3: #{conv_block.3} parent=0 // pred_check_branch
    %10 = sbr.rel (0) target = $region5
  $region4: #{conv_block.3} parent=0 // pred_region
    _
  $region5: #{conv_block.3} parent=0 // pred_fallthru
    _
  // Predicated region
  $region6: #{conv_block.3} parent=0 // pred_check
    _
  $region7: #{conv_block.3} parent=0 // pred_check_branch
    %12 = sbr.rel (0) target = $region9
  $region8: #{conv_block.3} parent=0 // pred_region
    _
  $region9: #{conv_block.3} parent=0 // pred_fallthru
    _
  // Predicated region
  $region10: #{conv_block.3} parent=0 // pred_check
    _
  $region11: #{conv_block.3} parent=0 // pred_check_branch
    %14 = sbr.rel (0) target = $region13
  $region12: #{conv_block.3} parent=0 // pred_region
    _
  $region13: #{conv_block.3} parent=0 // pred_fallthru
    _
  // Predicated region
  $region14: #{conv_block.3} parent=0 // pred_check
    _
  $region15: #{conv_block.3} parent=0 // pred_check_branch
    %16 = sbr.rel (0) target = $region17
  $region16: #{conv_block.3} parent=0 // pred_region
    _
  $region17: #{conv_block.3} parent=0 // pred_fallthru
    _
  %v18 = vld [vmem:[%s0] sm:$0xf]
  %v19 = vld [vmem:[%s0 + $0x4] sm:$0xf]
  %v20 = vld [vmem:[%s0 + $0x8] sm:$0xf]
  %v21 = vld [vmem:[%s0 + $0xc] sm:$0xf]
  %v22 = vld [vmem:[%s0 + $0x10] sm:$0xf]
  %v23 = vld [vmem:[%s0 + $0x14] sm:$0xf]
  %v24 = vld [vmem:[%s0 + $0x18] sm:$0xf]
  %v25 = vld [vmem:[%s0 + $0x1c] sm:$0xf]
  %v26 = vld [vmem:[%s0 + $0x20] sm:$0xf]
  %v27 = vld [vmem:[%s0 + $0x24] sm:$0xf]
  %v28 = vld [vmem:[%s0 + $0x28] sm:$0xf]
  %v29 = vld [vmem:[%s0 + $0x2c] sm:$0xf]
  %v30 = vld [vmem:[%s0 + $0x30] sm:$0xf]
  %v31 = vld [vmem:[%s0 + $0x34] sm:$0xf]
  %v32 = vld [vmem:[%s0 + $0x38] sm:$0xf]
  %v33 = vld [vmem:[%s0 + $0x3c] sm:$0xf]
  %v34 = vld [vmem:[%s0 + $0x40] sm:$0xf]
  %v35 = vld [vmem:[%s0 + $0x44] sm:$0xf]
  %v36 = vld [vmem:[%s0 + $0x48] sm:$0xf]
  %v37 = vld [vmem:[%s0 + $0x4c] sm:$0xf]
  %v38 = vld [vmem:[%s0 + $0x50] sm:$0xf]
  %v39 = vld [vmem:[%s0 + $0x54] sm:$0xf]
  %v40 = vld [vmem:[%s0 + $0x58] sm:$0xf]
  %v41 = vld [vmem:[%s0 + $0x5c] sm:$0xf]
  %v42 = vld [vmem:[%s0 + $0x60] sm:$0xf]
  %v43 = vld [vmem:[%s0 + $0x64] sm:$0xf]
  %v44 = vld [vmem:[%s0 + $0x68] sm:$0xf]
  %v45 = vld [vmem:[%s0 + $0x6c] sm:$0xf]
  %v46 = vld [vmem:[%s0 + $0x70] sm:$0xf]
  %v47 = vld [vmem:[%s0 + $0x74] sm:$0xf]
  %v48 = vld [vmem:[%s0 + $0x78] sm:$0xf]
  %v49 = vld [vmem:[%s0 + $0x7c] sm:$0xf]
  %v50 = vld [vmem:[%s0 + $0x80] sm:$0xf]
  %v51 = vld [vmem:[%s0 + $0x84] sm:$0xf]
  %v52 = vld [vmem:[%s0 + $0x88] sm:$0xf]
  %v53 = vld [vmem:[%s0 + $0x8c] sm:$0xf]
  %v54 = vld [vmem:[%s0 + $0x90] sm:$0xf]
  %v55 = vld [vmem:[%s0 + $0x94] sm:$0xf]
  %v56 = vld [vmem:[%s0 + $0x98] sm:$0xf]
  %v57 = vld [vmem:[%s0 + $0x9c] sm:$0xf]
  %v58 = vld [vmem:[%s0 + $0xa0] sm:$0xf]
  %v59 = vld [vmem:[%s0 + $0xa4] sm:$0xf]
  %v60 = vld [vmem:[%s0 + $0xa8] sm:$0xf]
  %v61 = vld [vmem:[%s0 + $0xac] sm:$0xf]
  %v62 = vld [vmem:[%s0 + $0xb0] sm:$0xf]
  %v63 = vld [vmem:[%s0 + $0xb4] sm:$0xf]
  %v64 = vld [vmem:[%s0 + $0xb8] sm:$0xf]
  %v65 = vld [vmem:[%s0 + $0xbc] sm:$0xf]
  %v66 = vld [vmem:[%s0 + $0xc0] sm:$0xf]
  %v67 = vld [vmem:[%s0 + $0xc4] sm:$0xf]
  %v68 = vld [vmem:[%s0 + $0xc8] sm:$0xf]
  %v69 = vld [vmem:[%s0 + $0xcc] sm:$0xf]
  %v70 = vld [vmem:[%s0 + $0xd0] sm:$0xf]
  %v71 = vld [vmem:[%s0 + $0xd4] sm:$0xf]
  %v72 = vld [vmem:[%s0 + $0xd8] sm:$0xf]
  %v73 = vld [vmem:[%s0 + $0xdc] sm:$0xf]
  %v74 = vld [vmem:[%s0 + $0xe0] sm:$0xf]
  %v75 = vld [vmem:[%s0 + $0xe4] sm:$0xf]
  %v76 = vld [vmem:[%s0 + $0xe8] sm:$0xf]
  %v77 = vld [vmem:[%s0 + $0xec] sm:$0xf]
  %v78 = vld [vmem:[%s0 + $0xf0] sm:$0xf]
  %v79 = vld [vmem:[%s0 + $0xf4] sm:$0xf]
  %v80 = vld [vmem:[%s0 + $0xf8] sm:$0xf]
  %v81 = vld [vmem:[%s0 + $0xfc] sm:$0xf]
  %v82 = vld [vmem:[%s1] sm:$0xf]
  %v83 = vld [vmem:[%s1 + $0x4] sm:$0xf]
  %v84 = vld [vmem:[%s1 + $0x8] sm:$0xf]
  %v85 = vld [vmem:[%s1 + $0xc] sm:$0xf]
  %v86 = vld [vmem:[%s1 + $0x10] sm:$0x3]
  %v151 = vunpack.c.l.b16 %v18
  %v152 = vunpack.c.l.b16 %v19
  %v153 = vunpack.c.l.b16 %v20
  %v154 = vunpack.c.l.b16 %v21
  %v155 = vunpack.c.l.b16 %v22
  %v156 = vunpack.c.l.b16 %v23
  %v157 = vunpack.c.l.b16 %v24
  %v158 = vunpack.c.l.b16 %v25
  %v159 = vunpack.c.l.b16 %v26
  %v160 = vunpack.c.l.b16 %v27
  %v161 = vunpack.c.l.b16 %v28
  %v162 = vunpack.c.l.b16 %v29
  %v163 = vunpack.c.l.b16 %v30
  %v164 = vunpack.c.l.b16 %v31
  %v165 = vunpack.c.l.b16 %v32
  %v166 = vunpack.c.l.b16 %v33
  %v167 = vunpack.c.l.b16 %v34
  %v168 = vunpack.c.l.b16 %v35
  %v169 = vunpack.c.l.b16 %v36
  %v170 = vunpack.c.l.b16 %v37
  %v171 = vunpack.c.l.b16 %v38
  %v172 = vunpack.c.l.b16 %v39
  %v173 = vunpack.c.l.b16 %v40
  %v174 = vunpack.c.l.b16 %v41
  %v175 = vunpack.c.l.b16 %v42
  %v176 = vunpack.c.l.b16 %v43
  %v177 = vunpack.c.l.b16 %v44
  %v178 = vunpack.c.l.b16 %v45
  %v179 = vunpack.c.l.b16 %v46
  %v180 = vunpack.c.l.b16 %v47
  %v181 = vunpack.c.l.b16 %v48
  %v182 = vunpack.c.l.b16 %v49
  %v183 = vunpack.c.l.b16 %v50
  %v184 = vunpack.c.l.b16 %v51
  %v185 = vunpack.c.l.b16 %v52
  %v186 = vunpack.c.l.b16 %v53
  %v187 = vunpack.c.l.b16 %v54
  %v188 = vunpack.c.l.b16 %v55
  %v189 = vunpack.c.l.b16 %v56
  %v190 = vunpack.c.l.b16 %v57
  %v191 = vunpack.c.l.b16 %v58
  %v192 = vunpack.c.l.b16 %v59
  %v193 = vunpack.c.l.b16 %v60
  %v194 = vunpack.c.l.b16 %v61
  %v195 = vunpack.c.l.b16 %v62
  %v196 = vunpack.c.l.b16 %v63
  %v197 = vunpack.c.l.b16 %v64
  %v198 = vunpack.c.l.b16 %v65
  %v199 = vunpack.c.l.b16 %v66
  %v200 = vunpack.c.l.b16 %v67
  %v201 = vunpack.c.l.b16 %v68
  %v202 = vunpack.c.l.b16 %v69
  %v203 = vunpack.c.l.b16 %v70
  %v204 = vunpack.c.l.b16 %v71
  %v205 = vunpack.c.l.b16 %v72
  %v206 = vunpack.c.l.b16 %v73
  %v207 = vunpack.c.l.b16 %v74
  %v208 = vunpack.c.l.b16 %v75
  %v209 = vunpack.c.l.b16 %v76
  %v210 = vunpack.c.l.b16 %v77
  %v211 = vunpack.c.l.b16 %v78
  %v212 = vunpack.c.l.b16 %v79
  %v213 = vunpack.c.l.b16 %v80
  %v214 = vunpack.c.l.b16 %v81
  %v215 = vpack.c.b16 %v152, %v151
  %v216 = vpack.c.b16 %v154, %v153
  %v217 = vpack.c.b16 %v156, %v155
  %v218 = vpack.c.b16 %v158, %v157
  %v219 = vpack.c.b16 %v160, %v159
  %v220 = vpack.c.b16 %v162, %v161
  %v221 = vpack.c.b16 %v164, %v163
  %v222 = vpack.c.b16 %v166, %v165
  %v223 = vpack.c.b16 %v168, %v167
  %v224 = vpack.c.b16 %v170, %v169
  %v225 = vpack.c.b16 %v172, %v171
  %v226 = vpack.c.b16 %v174, %v173
  %v227 = vpack.c.b16 %v176, %v175
  %v228 = vpack.c.b16 %v178, %v177
  %v229 = vpack.c.b16 %v180, %v179
  %v230 = vpack.c.b16 %v182, %v181
  %v231 = vpack.c.b16 %v184, %v183
  %v232 = vpack.c.b16 %v186, %v185
  %v233 = vpack.c.b16 %v188, %v187
  %v234 = vpack.c.b16 %v190, %v189
  %v235 = vpack.c.b16 %v192, %v191
  %v236 = vpack.c.b16 %v194, %v193
  %v237 = vpack.c.b16 %v196, %v195
  %v238 = vpack.c.b16 %v198, %v197
  %v239 = vpack.c.b16 %v200, %v199
  %v240 = vpack.c.b16 %v202, %v201
  %v241 = vpack.c.b16 %v204, %v203
  %v242 = vpack.c.b16 %v206, %v205
  %v243 = vpack.c.b16 %v208, %v207
  %v244 = vpack.c.b16 %v210, %v209
  %v245 = vpack.c.b16 %v212, %v211
  %v246 = vpack.c.b16 %v214, %v213
  %v252 = vunpack.c.l.b16 %v82
  %v253 = vunpack.c.l.b16 %v83
  %v254 = vunpack.c.l.b16 %v84
  %v255 = vunpack.c.l.b16 %v85
  %v256 = vunpack.c.l.b16 %v86
  %v257 = vpack.c.b16 %v253, %v252
  %v258 = vpack.c.b16 %v255, %v254
  %v259 = vpack.c.b16 %v256, %v256
  %vm262 = vcmask 293888
  %v264 = vsel %vm262, %v215, 0
  %v267 = vsel %vm262, %v216, 0
  %v270 = vsel %vm262, %v217, 0
  %v273 = vsel %vm262, %v218, 0
  %v276 = vsel %vm262, %v219, 0
  %v279 = vsel %vm262, %v220, 0
  %v282 = vsel %vm262, %v221, 0
  %v285 = vsel %vm262, %v222, 0
  %v288 = vsel %vm262, %v223, 0
  %v291 = vsel %vm262, %v224, 0
  %v294 = vsel %vm262, %v225, 0
  %v297 = vsel %vm262, %v226, 0
  %v300 = vsel %vm262, %v227, 0
  %v303 = vsel %vm262, %v228, 0
  %v306 = vsel %vm262, %v229, 0
  %v309 = vsel %vm262, %v230, 0
  %v312 = vsel %vm262, %v231, 0
  %v315 = vsel %vm262, %v232, 0
  %v318 = vsel %vm262, %v233, 0
  %v321 = vsel %vm262, %v234, 0
  %v324 = vsel %vm262, %v235, 0
  %v327 = vsel %vm262, %v236, 0
  %v330 = vsel %vm262, %v237, 0
  %v333 = vsel %vm262, %v238, 0
  %v336 = vsel %vm262, %v239, 0
  %v339 = vsel %vm262, %v240, 0
  %v342 = vsel %vm262, %v241, 0
  %v345 = vsel %vm262, %v242, 0
  %v348 = vsel %vm262, %v243, 0
  %v351 = vsel %vm262, %v244, 0
  %v354 = vsel %vm262, %v245, 0
  %v357 = vsel %vm262, %v246, 0
  %vm359 = vcmask 1041408
  %v361 = vsel %vm359, %v259, 0
  %363 = vmatpush.bf16.msra.mxu0 0
  %364 = vmatpush.bf16.msra.mxu0 0
  %365 = vmatpush.bf16.msra.mxu0 0
  %366 = vmatpush.bf16.msra.mxu0 0
  %367 = vmatpush.bf16.msra.mxu0 0
  %368 = vmatpush.bf16.msra.mxu0 %v361
  %369 = vmatpush.bf16.msra.mxu0 %v258
  %370 = vmatpush.bf16.msra.mxu0 %v257
  %371 = vmatmul.bf16.gmra.mxu0 %v264
  %v372 = vpop.f32.mrf.mxu0
  %v373 = vadd.f32 0.0, %v372
  %v374 = vpop.f32.mrf.mxu0
  %v375 = vadd.f32 0.0, %v374
  %376 = vmatmul.bf16.gmra.mxu0 %v267
  %v377 = vpop.f32.mrf.mxu0
  %v378 = vadd.f32 0.0, %v377
  %v379 = vpop.f32.mrf.mxu0
  %v380 = vadd.f32 0.0, %v379
  %381 = vmatmul.bf16.gmra.mxu0 %v270
  %v382 = vpop.f32.mrf.mxu0
  %v383 = vadd.f32 0.0, %v382
  %v384 = vpop.f32.mrf.mxu0
  %v385 = vadd.f32 0.0, %v384
  %386 = vmatmul.bf16.gmra.mxu0 %v273
  %v387 = vpop.f32.mrf.mxu0
  %v388 = vadd.f32 0.0, %v387
  %v389 = vpop.f32.mrf.mxu0
  %v390 = vadd.f32 0.0, %v389
  %391 = vmatmul.bf16.gmra.mxu0 %v276
  %v392 = vpop.f32.mrf.mxu0
  %v393 = vadd.f32 0.0, %v392
  %v394 = vpop.f32.mrf.mxu0
  %v395 = vadd.f32 0.0, %v394
  %396 = vmatmul.bf16.gmra.mxu0 %v279
  %v397 = vpop.f32.mrf.mxu0
  %v398 = vadd.f32 0.0, %v397
  %v399 = vpop.f32.mrf.mxu0
  %v400 = vadd.f32 0.0, %v399
  %401 = vmatmul.bf16.gmra.mxu0 %v282
  %v402 = vpop.f32.mrf.mxu0
  %v403 = vadd.f32 0.0, %v402
  %v404 = vpop.f32.mrf.mxu0
  %v405 = vadd.f32 0.0, %v404
  %406 = vmatmul.bf16.gmra.mxu0 %v285
  %v407 = vpop.f32.mrf.mxu0
  %v408 = vadd.f32 0.0, %v407
  %v409 = vpop.f32.mrf.mxu0
  %v410 = vadd.f32 0.0, %v409
  %411 = vmatmul.bf16.gmra.mxu0 %v288
  %v412 = vpop.f32.mrf.mxu0
  %v413 = vadd.f32 0.0, %v412
  %v414 = vpop.f32.mrf.mxu0
  %v415 = vadd.f32 0.0, %v414
  %416 = vmatmul.bf16.gmra.mxu0 %v291
  %v417 = vpop.f32.mrf.mxu0
  %v418 = vadd.f32 0.0, %v417
  %v419 = vpop.f32.mrf.mxu0
  %v420 = vadd.f32 0.0, %v419
  %421 = vmatmul.bf16.gmra.mxu0 %v294
  %v422 = vpop.f32.mrf.mxu0
  %v423 = vadd.f32 0.0, %v422
  %v424 = vpop.f32.mrf.mxu0
  %v425 = vadd.f32 0.0, %v424
  %426 = vmatmul.bf16.gmra.mxu0 %v297
  %v427 = vpop.f32.mrf.mxu0
  %v428 = vadd.f32 0.0, %v427
  %v429 = vpop.f32.mrf.mxu0
  %v430 = vadd.f32 0.0, %v429
  %431 = vmatmul.bf16.gmra.mxu0 %v300
  %v432 = vpop.f32.mrf.mxu0
  %v433 = vadd.f32 0.0, %v432
  %v434 = vpop.f32.mrf.mxu0
  %v435 = vadd.f32 0.0, %v434
  %436 = vmatmul.bf16.gmra.mxu0 %v303
  %v437 = vpop.f32.mrf.mxu0
  %v438 = vadd.f32 0.0, %v437
  %v439 = vpop.f32.mrf.mxu0
  %v440 = vadd.f32 0.0, %v439
  %441 = vmatmul.bf16.gmra.mxu0 %v306
  %v442 = vpop.f32.mrf.mxu0
  %v443 = vadd.f32 0.0, %v442
  %v444 = vpop.f32.mrf.mxu0
  %v445 = vadd.f32 0.0, %v444
  %446 = vmatmul.bf16.gmra.mxu0 %v309
  %v447 = vpop.f32.mrf.mxu0
  %v448 = vadd.f32 0.0, %v447
  %v449 = vpop.f32.mrf.mxu0
  %v450 = vadd.f32 0.0, %v449
  %451 = vmatmul.bf16.gmra.mxu0 %v312
  %v452 = vpop.f32.mrf.mxu0
  %v453 = vadd.f32 0.0, %v452
  %v454 = vpop.f32.mrf.mxu0
  %v455 = vadd.f32 0.0, %v454
  %456 = vmatmul.bf16.gmra.mxu0 %v315
  %v457 = vpop.f32.mrf.mxu0
  %v458 = vadd.f32 0.0, %v457
  %v459 = vpop.f32.mrf.mxu0
  %v460 = vadd.f32 0.0, %v459
  %461 = vmatmul.bf16.gmra.mxu0 %v318
  %v462 = vpop.f32.mrf.mxu0
  %v463 = vadd.f32 0.0, %v462
  %v464 = vpop.f32.mrf.mxu0
  %v465 = vadd.f32 0.0, %v464
  %466 = vmatmul.bf16.gmra.mxu0 %v321
  %v467 = vpop.f32.mrf.mxu0
  %v468 = vadd.f32 0.0, %v467
  %v469 = vpop.f32.mrf.mxu0
  %v470 = vadd.f32 0.0, %v469
  %471 = vmatmul.bf16.gmra.mxu0 %v324
  %v472 = vpop.f32.mrf.mxu0
  %v473 = vadd.f32 0.0, %v472
  %v474 = vpop.f32.mrf.mxu0
  %v475 = vadd.f32 0.0, %v474
  %476 = vmatmul.bf16.gmra.mxu0 %v327
  %v477 = vpop.f32.mrf.mxu0
  %v478 = vadd.f32 0.0, %v477
  %v479 = vpop.f32.mrf.mxu0
  %v480 = vadd.f32 0.0, %v479
  %481 = vmatmul.bf16.gmra.mxu0 %v330
  %v482 = vpop.f32.mrf.mxu0
  %v483 = vadd.f32 0.0, %v482
  %v484 = vpop.f32.mrf.mxu0
  %v485 = vadd.f32 0.0, %v484
  %486 = vmatmul.bf16.gmra.mxu0 %v333
  %v487 = vpop.f32.mrf.mxu0
  %v488 = vadd.f32 0.0, %v487
  %v489 = vpop.f32.mrf.mxu0
  %v490 = vadd.f32 0.0, %v489
  %491 = vmatmul.bf16.gmra.mxu0 %v336
  %v492 = vpop.f32.mrf.mxu0
  %v493 = vadd.f32 0.0, %v492
  %v494 = vpop.f32.mrf.mxu0
  %v495 = vadd.f32 0.0, %v494
  %496 = vmatmul.bf16.gmra.mxu0 %v339
  %v497 = vpop.f32.mrf.mxu0
  %v498 = vadd.f32 0.0, %v497
  %v499 = vpop.f32.mrf.mxu0
  %v500 = vadd.f32 0.0, %v499
  %501 = vmatmul.bf16.gmra.mxu0 %v342
  %v502 = vpop.f32.mrf.mxu0
  %v503 = vadd.f32 0.0, %v502
  %v504 = vpop.f32.mrf.mxu0
  %v505 = vadd.f32 0.0, %v504
  %506 = vmatmul.bf16.gmra.mxu0 %v345
  %v507 = vpop.f32.mrf.mxu0
  %v508 = vadd.f32 0.0, %v507
  %v509 = vpop.f32.mrf.mxu0
  %v510 = vadd.f32 0.0, %v509
  %511 = vmatmul.bf16.gmra.mxu0 %v348
  %v512 = vpop.f32.mrf.mxu0
  %v513 = vadd.f32 0.0, %v512
  %v514 = vpop.f32.mrf.mxu0
  %v515 = vadd.f32 0.0, %v514
  %516 = vmatmul.bf16.gmra.mxu0 %v351
  %v517 = vpop.f32.mrf.mxu0
  %v518 = vadd.f32 0.0, %v517
  %v519 = vpop.f32.mrf.mxu0
  %v520 = vadd.f32 0.0, %v519
  %521 = vmatmul.bf16.gmra.mxu0 %v354
  %v522 = vpop.f32.mrf.mxu0
  %v523 = vadd.f32 0.0, %v522
  %v524 = vpop.f32.mrf.mxu0
  %v525 = vadd.f32 0.0, %v524
  %526 = vmatmul.bf16.gmra.mxu0 %v357
  %v527 = vpop.f32.mrf.mxu0
  %v528 = vadd.f32 0.0, %v527
  %v529 = vpop.f32.mrf.mxu0
  %v530 = vadd.f32 0.0, %v529
  %531 = vdwg.mxu0
  %v532 = vld [vmem:[%s2] sm:$0x1]
  %v534 = vperm.slane %v532, 0
  %v536 = vmul.f32 %v373, %v534
  %v537 = vmul.f32 %v375, %v534
  %v538 = vmul.f32 %v378, %v534
  %v539 = vmul.f32 %v380, %v534
  %v540 = vmul.f32 %v383, %v534
  %v541 = vmul.f32 %v385, %v534
  %v542 = vmul.f32 %v388, %v534
  %v543 = vmul.f32 %v390, %v534
  %v544 = vmul.f32 %v393, %v534
  %v545 = vmul.f32 %v395, %v534
  %v546 = vmul.f32 %v398, %v534
  %v547 = vmul.f32 %v400, %v534
  %v548 = vmul.f32 %v403, %v534
  %v549 = vmul.f32 %v405, %v534
  %v550 = vmul.f32 %v408, %v534
  %v551 = vmul.f32 %v410, %v534
  %v552 = vmul.f32 %v413, %v534
  %v553 = vmul.f32 %v415, %v534
  %v554 = vmul.f32 %v418, %v534
  %v555 = vmul.f32 %v420, %v534
  %v556 = vmul.f32 %v423, %v534
  %v557 = vmul.f32 %v425, %v534
  %v558 = vmul.f32 %v428, %v534
  %v559 = vmul.f32 %v430, %v534
  %v560 = vmul.f32 %v433, %v534
  %v561 = vmul.f32 %v435, %v534
  %v562 = vmul.f32 %v438, %v534
  %v563 = vmul.f32 %v440, %v534
  %v564 = vmul.f32 %v443, %v534
  %v565 = vmul.f32 %v445, %v534
  %v566 = vmul.f32 %v448, %v534
  %v567 = vmul.f32 %v450, %v534
  %v568 = vmul.f32 %v453, %v534
  %v569 = vmul.f32 %v455, %v534
  %v570 = vmul.f32 %v458, %v534
  %v571 = vmul.f32 %v460, %v534
  %v572 = vmul.f32 %v463, %v534
  %v573 = vmul.f32 %v465, %v534
  %v574 = vmul.f32 %v468, %v534
  %v575 = vmul.f32 %v470, %v534
  %v576 = vmul.f32 %v473, %v534
  %v577 = vmul.f32 %v475, %v534
  %v578 = vmul.f32 %v478, %v534
  %v579 = vmul.f32 %v480, %v534
  %v580 = vmul.f32 %v483, %v534
  %v581 = vmul.f32 %v485, %v534
  %v582 = vmul.f32 %v488, %v534
  %v583 = vmul.f32 %v490, %v534
  %v584 = vmul.f32 %v493, %v534
  %v585 = vmul.f32 %v495, %v534
  %v586 = vmul.f32 %v498, %v534
  %v587 = vmul.f32 %v500, %v534
  %v588 = vmul.f32 %v503, %v534
  %v589 = vmul.f32 %v505, %v534
  %v590 = vmul.f32 %v508, %v534
  %v591 = vmul.f32 %v510, %v534
  %v592 = vmul.f32 %v513, %v534
  %v593 = vmul.f32 %v515, %v534
  %v594 = vmul.f32 %v518, %v534
  %v595 = vmul.f32 %v520, %v534
  %v596 = vmul.f32 %v523, %v534
  %v597 = vmul.f32 %v525, %v534
  %v598 = vmul.f32 %v528, %v534
  %v599 = vmul.f32 %v530, %v534
  %v600 = vld [vmem:[%s3] sm:$0x1]
  %v602 = vperm.slane %v600, 0
  %v604 = vadd.f32 %v536, %v602
  %v605 = vadd.f32 %v537, %v602
  %v606 = vadd.f32 %v538, %v602
  %v607 = vadd.f32 %v539, %v602
  %v608 = vadd.f32 %v540, %v602
  %v609 = vadd.f32 %v541, %v602
  %v610 = vadd.f32 %v542, %v602
  %v611 = vadd.f32 %v543, %v602
  %v612 = vadd.f32 %v544, %v602
  %v613 = vadd.f32 %v545, %v602
  %v614 = vadd.f32 %v546, %v602
  %v615 = vadd.f32 %v547, %v602
  %v616 = vadd.f32 %v548, %v602
  %v617 = vadd.f32 %v549, %v602
  %v618 = vadd.f32 %v550, %v602
  %v619 = vadd.f32 %v551, %v602
  %v620 = vadd.f32 %v552, %v602
  %v621 = vadd.f32 %v553, %v602
  %v622 = vadd.f32 %v554, %v602
  %v623 = vadd.f32 %v555, %v602
  %v624 = vadd.f32 %v556, %v602
  %v625 = vadd.f32 %v557, %v602
  %v626 = vadd.f32 %v558, %v602
  %v627 = vadd.f32 %v559, %v602
  %v628 = vadd.f32 %v560, %v602
  %v629 = vadd.f32 %v561, %v602
  %v630 = vadd.f32 %v562, %v602
  %v631 = vadd.f32 %v563, %v602
  %v632 = vadd.f32 %v564, %v602
  %v633 = vadd.f32 %v565, %v602
  %v634 = vadd.f32 %v566, %v602
  %v635 = vadd.f32 %v567, %v602
  %v636 = vadd.f32 %v568, %v602
  %v637 = vadd.f32 %v569, %v602
  %v638 = vadd.f32 %v570, %v602
  %v639 = vadd.f32 %v571, %v602
  %v640 = vadd.f32 %v572, %v602
  %v641 = vadd.f32 %v573, %v602
  %v642 = vadd.f32 %v574, %v602
  %v643 = vadd.f32 %v575, %v602
  %v644 = vadd.f32 %v576, %v602
  %v645 = vadd.f32 %v577, %v602
  %v646 = vadd.f32 %v578, %v602
  %v647 = vadd.f32 %v579, %v602
  %v648 = vadd.f32 %v580, %v602
  %v649 = vadd.f32 %v581, %v602
  %v650 = vadd.f32 %v582, %v602
  %v651 = vadd.f32 %v583, %v602
  %v652 = vadd.f32 %v584, %v602
  %v653 = vadd.f32 %v585, %v602
  %v654 = vadd.f32 %v586, %v602
  %v655 = vadd.f32 %v587, %v602
  %v656 = vadd.f32 %v588, %v602
  %v657 = vadd.f32 %v589, %v602
  %v658 = vadd.f32 %v590, %v602
  %v659 = vadd.f32 %v591, %v602
  %v660 = vadd.f32 %v592, %v602
  %v661 = vadd.f32 %v593, %v602
  %v662 = vadd.f32 %v594, %v602
  %v663 = vadd.f32 %v595, %v602
  %v664 = vadd.f32 %v596, %v602
  %v665 = vadd.f32 %v597, %v602
  %v666 = vadd.f32 %v598, %v602
  %v667 = vadd.f32 %v599, %v602
  %668 = vst [vmem:[%s4] sm:$0xff] %v604
  %669 = vst [vmem:[%s4 + $0x8] sm:$0xff] %v605
  %670 = vst [vmem:[%s4 + $0x10] sm:$0xff] %v606
  %671 = vst [vmem:[%s4 + $0x18] sm:$0xff] %v607
  %672 = vst [vmem:[%s4 + $0x20] sm:$0xff] %v608
  %673 = vst [vmem:[%s4 + $0x28] sm:$0xff] %v609
  %674 = vst [vmem:[%s4 + $0x30] sm:$0xff] %v610
  %675 = vst [vmem:[%s4 + $0x38] sm:$0xff] %v611
  %676 = vst [vmem:[%s4 + $0x40] sm:$0xff] %v612
  %677 = vst [vmem:[%s4 + $0x48] sm:$0xff] %v613
  %678 = vst [vmem:[%s4 + $0x50] sm:$0xff] %v614
  %679 = vst [vmem:[%s4 + $0x58] sm:$0xff] %v615
  %680 = vst [vmem:[%s4 + $0x60] sm:$0xff] %v616
  %681 = vst [vmem:[%s4 + $0x68] sm:$0xff] %v617
  %682 = vst [vmem:[%s4 + $0x70] sm:$0xff] %v618
  %683 = vst [vmem:[%s4 + $0x78] sm:$0xff] %v619
  %684 = vst [vmem:[%s4 + $0x80] sm:$0xff] %v620
  %685 = vst [vmem:[%s4 + $0x88] sm:$0xff] %v621
  %686 = vst [vmem:[%s4 + $0x90] sm:$0xff] %v622
  %687 = vst [vmem:[%s4 + $0x98] sm:$0xff] %v623
  %688 = vst [vmem:[%s4 + $0xa0] sm:$0xff] %v624
  %689 = vst [vmem:[%s4 + $0xa8] sm:$0xff] %v625
  %690 = vst [vmem:[%s4 + $0xb0] sm:$0xff] %v626
  %691 = vst [vmem:[%s4 + $0xb8] sm:$0xff] %v627
  %692 = vst [vmem:[%s4 + $0xc0] sm:$0xff] %v628
  %693 = vst [vmem:[%s4 + $0xc8] sm:$0xff] %v629
  %694 = vst [vmem:[%s4 + $0xd0] sm:$0xff] %v630
  %695 = vst [vmem:[%s4 + $0xd8] sm:$0xff] %v631
  %696 = vst [vmem:[%s4 + $0xe0] sm:$0xff] %v632
  %697 = vst [vmem:[%s4 + $0xe8] sm:$0xff] %v633
  %698 = vst [vmem:[%s4 + $0xf0] sm:$0xff] %v634
  %699 = vst [vmem:[%s4 + $0xf8] sm:$0xff] %v635
  %700 = vst [vmem:[%s4 + $0x100] sm:$0xff] %v636
  %701 = vst [vmem:[%s4 + $0x108] sm:$0xff] %v637
  %702 = vst [vmem:[%s4 + $0x110] sm:$0xff] %v638
  %703 = vst [vmem:[%s4 + $0x118] sm:$0xff] %v639
  %704 = vst [vmem:[%s4 + $0x120] sm:$0xff] %v640
  %705 = vst [vmem:[%s4 + $0x128] sm:$0xff] %v641
  %706 = vst [vmem:[%s4 + $0x130] sm:$0xff] %v642
  %707 = vst [vmem:[%s4 + $0x138] sm:$0xff] %v643
  %708 = vst [vmem:[%s4 + $0x140] sm:$0xff] %v644
  %709 = vst [vmem:[%s4 + $0x148] sm:$0xff] %v645
  %710 = vst [vmem:[%s4 + $0x150] sm:$0xff] %v646
  %711 = vst [vmem:[%s4 + $0x158] sm:$0xff] %v647
  %712 = vst [vmem:[%s4 + $0x160] sm:$0xff] %v648
  %713 = vst [vmem:[%s4 + $0x168] sm:$0xff] %v649
  %714 = vst [vmem:[%s4 + $0x170] sm:$0xff] %v650
  %715 = vst [vmem:[%s4 + $0x178] sm:$0xff] %v651
  %716 = vst [vmem:[%s4 + $0x180] sm:$0xff] %v652
  %717 = vst [vmem:[%s4 + $0x188] sm:$0xff] %v653
  %718 = vst [vmem:[%s4 + $0x190] sm:$0xff] %v654
  %719 = vst [vmem:[%s4 + $0x198] sm:$0xff] %v655
  %720 = vst [vmem:[%s4 + $0x1a0] sm:$0xff] %v656
  %721 = vst [vmem:[%s4 + $0x1a8] sm:$0xff] %v657
  %722 = vst [vmem:[%s4 + $0x1b0] sm:$0xff] %v658
  %723 = vst [vmem:[%s4 + $0x1b8] sm:$0xff] %v659
  %724 = vst [vmem:[%s4 + $0x1c0] sm:$0xff] %v660
  %725 = vst [vmem:[%s4 + $0x1c8] sm:$0xff] %v661
  %726 = vst [vmem:[%s4 + $0x1d0] sm:$0xff] %v662
  %727 = vst [vmem:[%s4 + $0x1d8] sm:$0xff] %v663
  %728 = vst [vmem:[%s4 + $0x1e0] sm:$0xff] %v664
  %729 = vst [vmem:[%s4 + $0x1e8] sm:$0xff] %v665
  %730 = vst [vmem:[%s4 + $0x1f0] sm:$0xff] %v666
  %731 = vst [vmem:[%s4 + $0x1f8] sm:$0xff] %v667
  // Predicated region
  $region18: #{conv_block.3} parent=0 // pred_check
    _
  $region19: #{conv_block.3} parent=0 // pred_check_branch
    %733 = sbr.rel (0) target = $region21
  $region20: #{conv_block.3} parent=0 // pred_region
    _
  $region21: #{conv_block.3} parent=0 // pred_fallthru
    _
  // Predicated region
  $region22: #{conv_block.3} parent=0 // pred_check
    _
  $region23: #{conv_block.3} parent=0 // pred_check_branch
    %735 = sbr.rel (0) target = $region25
  $region24: #{conv_block.3} parent=0 // pred_region
    _
  $region25: #{conv_block.3} parent=0 // pred_fallthru
    _

</llo_original>
